<compile_context>
chip_gen: v6e
topology: v6e:2x2x1
jax: 0.10.0
libtpu: 0.0.40
codegen_flags: <defaults>
</compile_context>

<pallas_src>
import functools

import jax
import jax.numpy as jnp
from jax.experimental import pallas as pl
from jax.experimental.pallas import tpu as pltpu

BN_EPS = 1e-5


def _netb_netc_fused_kernel(x_ref, wb_ref, gamma_ref, beta_ref, wc_ref, bc_ref,
                            fea_ref, out_ref):
    j = pl.program_id(0)

    # Bottleneck Linear: cast the f32 x tile to bf16 in-kernel (VPU, hidden
    # under the DMA) -> (B, TN) f32 accumulation on the MXU.
    x = x_ref[...].astype(jnp.bfloat16)
    y = jnp.dot(x, wb_ref[...], preferred_element_type=jnp.float32)

    # Training-mode BatchNorm1d fused into a per-column scale/shift.
    # Centered variance form (cancellation-safe); the extra subtract is free
    # VPU slack in this DMA-bound kernel.
    mean = jnp.mean(y, axis=0, keepdims=True)                       # (1, TN)
    var = jnp.mean((y - mean) * (y - mean), axis=0, keepdims=True)  # (1, TN)
    s = gamma_ref[...] * jax.lax.rsqrt(var + BN_EPS)                # (1, TN)
    t = beta_ref[...] - mean * s                                    # (1, TN)
    fea = y * s + t                                                 # (B, TN) f32
    fea_ref[...] = fea.astype(fea_ref.dtype)

    # Weight-norm classifier fused in: logits accumulate over the D tiles in
    # the resident f32 output block (constant output block index).
    @pl.when(j == 0)
    def _():
        out_ref[...] = jnp.broadcast_to(bc_ref[...], out_ref.shape).astype(
            out_ref.dtype)

    out_ref[...] += jnp.dot(fea.astype(jnp.bfloat16), wc_ref[...],
                            preferred_element_type=jnp.float32)


def _default_tile_n(d):
    # v6e: 256-wide tile matches the 2x256^2 MXU and gives unmasked 256-lane
    # stores.  v5e (4x128^2 MXU) and v7x (64 MiB VMEM): prefer 128.
    try:
        kind = jax.devices()[0].device_kind.lower()
    except Exception:  # pragma: no cover - defensive, e.g. no devices yet
        kind = ""
    prefer = (256, 128) if "v6" in kind else (128, 256)
    for tn in prefer:
        if d % tn == 0:
            return tn
    return d


def _vmem_bytes_estimate(B, F, tn, C, fea_itemsize):
    # Conservative: every block double-buffered by the pipeline.
    per_buf = (B * F * 4            # x tile (f32)
               + F * tn * 2         # bottleneck weight tile (bf16)
               + 2 * tn * 4         # gamma + beta tiles (f32)
               + tn * C * 2         # classifier weight tile (bf16)
               + C * 4              # classifier bias (f32)
               + B * tn * fea_itemsize
               + B * C * 4)         # logits accumulator (f32)
    return 2 * per_buf


@functools.partial(jax.jit, static_argnames=("tile_n", "fea_dtype"))
def all_model_head_forward(x, w_b, gamma, beta, w_c, b_c, *, tile_n=None,
                           fea_dtype=jnp.float32):
    """Fused netB + netC forward.

    x:     [B, F]  f32   pooled backbone features
    w_b:   [F, D]  bf16  bottleneck Linear weight, pre-transposed
    gamma: [1, D]  f32   BatchNorm1d weight
    beta:  [1, D]  f32   BatchNorm1d bias
    w_c:   [D, C]  bf16  weight-normed classifier weight, pre-transposed
    b_c:   [1, C]  f32   classifier bias
    Returns (fea [B, D] fea_dtype, out [B, C] f32) -- matching All_Model.forward.
    """
    B, F = x.shape
    D = w_b.shape[1]
    C = w_c.shape[1]
    tn = _default_tile_n(D) if tile_n is None else tile_n
    assert D % tn == 0, "bottleneck_dim must be divisible by the N tile"
    grid = (D // tn,)

    fea_itemsize = jnp.dtype(fea_dtype).itemsize
    cost = pl.CostEstimate(
        flops=2 * B * F * D + 2 * B * D * C,
        transcendentals=0,
        bytes_accessed=(4 * B * F + 2 * F * D + 2 * 4 * D + 2 * D * C + 4 * C
                        + fea_itemsize * B * D + 4 * B * C),
    )

    # The classifier logits accumulate across D tiles -> the grid axis is a
    # reduction ("arbitrary").
    cp_kwargs = dict(dimension_semantics=("arbitrary",))
    vmem_est = _vmem_bytes_estimate(B, F, tn, C, fea_itemsize)
    if vmem_est > (32 << 20):
        # Only raise the scoped VMEM limit when the blocks actually need it,
        # and never past v7x's 64 MiB physical VMEM.
        cp_kwargs["vmem_limit_bytes"] = min(vmem_est + (4 << 20), 60 << 20)

    return pl.pallas_call(
        _netb_netc_fused_kernel,
        out_shape=(jax.ShapeDtypeStruct((B, D), fea_dtype),
                   jax.ShapeDtypeStruct((B, C), jnp.float32)),
        grid=grid,
        in_specs=[
            pl.BlockSpec((B, F), lambda j: (0, 0)),    # x: whole batch, every tile
            pl.BlockSpec((F, tn), lambda j: (0, j)),   # bottleneck weight tile
            pl.BlockSpec((1, tn), lambda j: (0, j)),   # gamma tile
            pl.BlockSpec((1, tn), lambda j: (0, j)),   # beta tile
            pl.BlockSpec((tn, C), lambda j: (j, 0)),   # classifier weight tile
            pl.BlockSpec((1, C), lambda j: (0, 0)),    # classifier bias
        ],
        out_specs=[
            pl.BlockSpec((B, tn), lambda j: (0, j)),   # fea tile
            pl.BlockSpec((B, C), lambda j: (0, 0)),    # logits (resident accumulator)
        ],
        compiler_params=pltpu.CompilerParams(**cp_kwargs),
        cost_estimate=cost,
    )(x, w_b, gamma, beta, w_c, b_c)


def init_params(key, feature_dim, bottleneck_dim, class_num):
    k_b, k_c = jax.random.split(key)

    # netB bottleneck Linear: xavier_normal_ (std = sqrt(2/(fan_in+fan_out))).
    # Bias is zero-initialised and cancelled by training-mode BN, so not stored.
    std_b = (2.0 / (feature_dim + bottleneck_dim)) ** 0.5
    w_b = jax.random.normal(k_b, (bottleneck_dim, feature_dim), jnp.float32) * std_b
    # BatchNorm1d default init (init_weights is only applied to the Linear).
    gamma = jnp.ones((1, bottleneck_dim), jnp.float32)
    beta = jnp.zeros((1, bottleneck_dim), jnp.float32)

    # netC: weight_norm(Linear(bottleneck_dim, class_num)); xavier_normal_ v,
    # zero bias.  weight_norm init sets g = ||v|| (per output row, dim=0), so
    # the effective weight W_c = g * v / ||v|| equals v here; we resolve the
    # normalisation at init time regardless.
    std_c = (2.0 / (bottleneck_dim + class_num)) ** 0.5
    v = jax.random.normal(k_c, (class_num, bottleneck_dim), jnp.float32) * std_c
    row_norm = jnp.linalg.norm(v, axis=1, keepdims=True)
    g = row_norm
    w_c = g * v / row_norm                                  # [C, D]
    b_c = jnp.zeros((1, class_num), jnp.float32)

    # Pre-transpose and store matmul operands in bf16 ONCE (no per-call casts).
    return (w_b.T.astype(jnp.bfloat16), gamma, beta,
            w_c.T.astype(jnp.bfloat16), b_c)


if __name__ == "__main__":
    feature_dim = 32      # 2048 for the real resnet101 backbone; kept small here
    bottleneck_dim = 256  # real bottleneck width
    class_num = 12        # VisDA-C
    batch = 8

    key = jax.random.PRNGKey(0)
    k_x, k_p = jax.random.split(key)
    # Stand-in for netF(img): pooled backbone features.
    x = jax.random.normal(k_x, (batch, feature_dim), jnp.float32)
    w_b, gamma, beta, w_c, b_c = init_params(k_p, feature_dim, bottleneck_dim,
                                             class_num)

    # Device-default tile (256 on v6e, 128 elsewhere).
    fea, out = all_model_head_forward(x, w_b, gamma, beta, w_c, b_c)
    jax.block_until_ready((fea, out))

    # Explicit 128-wide tiling -> 2-step grid, exercises the logits accumulator.
    fea2, out2 = all_model_head_forward(x, w_b, gamma, beta, w_c, b_c, tile_n=128)
    jax.block_until_ready((fea2, out2))

    # Plain-JAX reference with matching bf16 operand rounding / f32 math.
    xb = x.astype(jnp.bfloat16).astype(jnp.float32)
    wbf = w_b.astype(jnp.float32)
    y = xb @ wbf
    mean = y.mean(axis=0, keepdims=True)
    var = ((y - mean) ** 2).mean(axis=0, keepdims=True)
    fea_ref = (y - mean) / jnp.sqrt(var + BN_EPS) * gamma + beta
    out_ref = (fea_ref.astype(jnp.bfloat16).astype(jnp.float32)
               @ w_c.astype(jnp.float32) + b_c)

    for f, o in ((fea, out), (fea2, out2)):
        assert jnp.allclose(f, fea_ref, atol=5e-3, rtol=5e-3), "fea mismatch"
        assert jnp.allclose(o, out_ref, atol=3e-2, rtol=3e-2), "logits mismatch"

    print("KERNEL_OK")
</pallas_src>

<mosaic_0001>
module attributes {stable_mosaic.version = 11 : i64} {
  func.func @_netb_netc_fused_kernel(%arg0: i32, %arg1: memref<8x32xf32, #tpu.memory_space<vmem>>, %arg2: memref<32x128xbf16, #tpu.memory_space<vmem>>, %arg3: memref<1x128xf32, #tpu.memory_space<vmem>>, %arg4: memref<1x128xf32, #tpu.memory_space<vmem>>, %arg5: memref<128x12xbf16, #tpu.memory_space<vmem>>, %arg6: memref<1x12xf32, #tpu.memory_space<vmem>>, %arg7: memref<8x128xf32, #tpu.memory_space<vmem>>, %arg8: memref<8x12xf32, #tpu.memory_space<vmem>>) attributes {dimension_semantics = [#tpu.dimension_semantics<arbitrary>], iteration_bounds = array<i64: 2>, scalar_prefetch = 0 : i64, scratch_operands = 0 : i64, tpu.core_type = #tpu.core_type<tc>, window_params = [{pipeline_mode = #tpu.pipeline_mode<synchronous>, transform_indices = @transform_0, window_bounds = array<i64: 8, 32>}, {transform_indices = @transform_1, window_bounds = array<i64: 32, 128>}, {transform_indices = @transform_2, window_bounds = array<i64: 1, 128>}, {transform_indices = @transform_3, window_bounds = array<i64: 1, 128>}, {transform_indices = @transform_4, window_bounds = array<i64: 128, 12>}, {pipeline_mode = #tpu.pipeline_mode<synchronous>, transform_indices = @transform_5, window_bounds = array<i64: 1, 12>}, {transform_indices = @transform_6, window_bounds = array<i64: 8, 128>}, {pipeline_mode = #tpu.pipeline_mode<synchronous>, transform_indices = @transform_7, window_bounds = array<i64: 8, 12>}]} {
    %c0 = arith.constant 0 : index
    %c0_0 = arith.constant 0 : index
    %0 = vector.load %arg1[%c0, %c0_0] : memref<8x32xf32, #tpu.memory_space<vmem>>, vector<8x32xf32>
    %1 = arith.truncf %0 : vector<8x32xf32> to vector<8x32xbf16>
    %c0_1 = arith.constant 0 : index
    %c0_2 = arith.constant 0 : index
    %2 = vector.load %arg2[%c0_1, %c0_2] : memref<32x128xbf16, #tpu.memory_space<vmem>>, vector<32x128xbf16>
    %cst = arith.constant dense<0.000000e+00> : vector<8x128xf32>
    %3 = tpu.matmul %1, %2, %cst {dimension_numbers = #tpu.dot_dimension_numbers<[1], [0], [0], [1], [0, 0, 1, 1], [], []>} : vector<8x32xbf16>, vector<32x128xbf16>, vector<8x128xf32> -> vector<8x128xf32>
    %cst_3 = arith.constant dense<0.000000e+00> : vector<128xf32>
    %4 = vector.multi_reduction <add>, %3, %cst_3 [0] : vector<8x128xf32> to vector<128xf32>
    %5 = vector.shape_cast %4 : vector<128xf32> to vector<1x128xf32>
    %cst_4 = arith.constant 8.000000e+00 : f32
    %6 = vector.broadcast %cst_4 : f32 to vector<1x128xf32>
    %7 = arith.divf %5, %6 : vector<1x128xf32>
    %8 = vector.broadcast %7 : vector<1x128xf32> to vector<8x128xf32>
    %9 = arith.subf %3, %8 : vector<8x128xf32>
    %10 = vector.broadcast %7 : vector<1x128xf32> to vector<8x128xf32>
    %11 = arith.subf %3, %10 : vector<8x128xf32>
    %12 = arith.mulf %9, %11 : vector<8x128xf32>
    %cst_5 = arith.constant dense<0.000000e+00> : vector<128xf32>
    %13 = vector.multi_reduction <add>, %12, %cst_5 [0] : vector<8x128xf32> to vector<128xf32>
    %14 = vector.shape_cast %13 : vector<128xf32> to vector<1x128xf32>
    %cst_6 = arith.constant 8.000000e+00 : f32
    %15 = vector.broadcast %cst_6 : f32 to vector<1x128xf32>
    %16 = arith.divf %14, %15 : vector<1x128xf32>
    %c0_7 = arith.constant 0 : index
    %c0_8 = arith.constant 0 : index
    %17 = vector.load %arg3[%c0_7, %c0_8] : memref<1x128xf32, #tpu.memory_space<vmem>>, vector<1x128xf32>
    %cst_9 = arith.constant 9.99999974E-6 : f32
    %18 = vector.broadcast %cst_9 : f32 to vector<1x128xf32>
    %19 = arith.addf %16, %18 : vector<1x128xf32>
    %20 = math.rsqrt %19 : vector<1x128xf32>
    %21 = arith.mulf %17, %20 : vector<1x128xf32>
    %c0_10 = arith.constant 0 : index
    %c0_11 = arith.constant 0 : index
    %22 = vector.load %arg4[%c0_10, %c0_11] : memref<1x128xf32, #tpu.memory_space<vmem>>, vector<1x128xf32>
    %23 = arith.mulf %7, %21 : vector<1x128xf32>
    %24 = arith.subf %22, %23 : vector<1x128xf32>
    %25 = vector.broadcast %21 : vector<1x128xf32> to vector<8x128xf32>
    %26 = arith.mulf %3, %25 : vector<8x128xf32>
    %27 = vector.broadcast %24 : vector<1x128xf32> to vector<8x128xf32>
    %28 = arith.addf %26, %27 : vector<8x128xf32>
    %c0_12 = arith.constant 0 : index
    %c0_13 = arith.constant 0 : index
    %29 = vector.load %arg7[%c0_12, %c0_13] : memref<8x128xf32, #tpu.memory_space<vmem>>, vector<8x128xf32>
    tpu.vector_store %arg7[%c0_12, %c0_13], %28 {strides = array<i32>} : memref<8x128xf32, #tpu.memory_space<vmem>>, vector<8x128xf32>,
    %c0_i32 = arith.constant 0 : i32
    %30 = arith.cmpi eq, %arg0, %c0_i32 : i32
    %31 = arith.extui %30 : i1 to i32
    %c0_i32_14 = arith.constant 0 : i32
    %32 = arith.cmpi ne, %31, %c0_i32_14 : i32
    scf.if %32 {
      %c0_22 = arith.constant 0 : index
      %c0_23 = arith.constant 0 : index
      %39 = vector.load %arg6[%c0_22, %c0_23] : memref<1x12xf32, #tpu.memory_space<vmem>>, vector<1x12xf32>
      %40 = vector.shape_cast %39 : vector<1x12xf32> to vector<1x12xf32>
      %41 = vector.broadcast %40 : vector<1x12xf32> to vector<8x12xf32>
      %c0_24 = arith.constant 0 : index
      %c0_25 = arith.constant 0 : index
      %42 = vector.load %arg8[%c0_24, %c0_25] : memref<8x12xf32, #tpu.memory_space<vmem>>, vector<8x12xf32>
      tpu.vector_store %arg8[%c0_24, %c0_25], %41 {strides = array<i32>} : memref<8x12xf32, #tpu.memory_space<vmem>>, vector<8x12xf32>,
    } else {
    }
    %c0_15 = arith.constant 0 : index
    %c0_16 = arith.constant 0 : index
    %33 = vector.load %arg8[%c0_15, %c0_16] : memref<8x12xf32, #tpu.memory_space<vmem>>, vector<8x12xf32>
    %34 = arith.truncf %28 : vector<8x128xf32> to vector<8x128xbf16>
    %c0_17 = arith.constant 0 : index
    %c0_18 = arith.constant 0 : index
    %35 = vector.load %arg5[%c0_17, %c0_18] : memref<128x12xbf16, #tpu.memory_space<vmem>>, vector<128x12xbf16>
    %cst_19 = arith.constant dense<0.000000e+00> : vector<8x12xf32>
    %36 = tpu.matmul %34, %35, %cst_19 {dimension_numbers = #tpu.dot_dimension_numbers<[1], [0], [0], [1], [0, 0, 1, 1], [], []>} : vector<8x128xbf16>, vector<128x12xbf16>, vector<8x12xf32> -> vector<8x12xf32>
    %37 = arith.addf %33, %36 : vector<8x12xf32>
    %c0_20 = arith.constant 0 : index
    %c0_21 = arith.constant 0 : index
    %38 = vector.load %arg8[%c0_20, %c0_21] : memref<8x12xf32, #tpu.memory_space<vmem>>, vector<8x12xf32>
    tpu.vector_store %arg8[%c0_20, %c0_21], %37 {strides = array<i32>} : memref<8x12xf32, #tpu.memory_space<vmem>>, vector<8x12xf32>,
    return
  }
  func.func @transform_0(%arg0: i32) -> (i32, i32) {
    %c0_i32 = arith.constant 0 : i32
    %c0_i32_0 = arith.constant 0 : i32
    %c0_i32_1 = arith.constant 0 : i32
    return %c0_i32, %c0_i32_0 : i32, i32
  }
  func.func @transform_1(%arg0: i32) -> (i32, i32) {
    %c0_i32 = arith.constant 0 : i32
    %c0_i32_0 = arith.constant 0 : i32
    return %c0_i32, %arg0 : i32, i32
  }
  func.func @transform_2(%arg0: i32) -> (i32, i32) {
    %c0_i32 = arith.constant 0 : i32
    %c0_i32_0 = arith.constant 0 : i32
    return %c0_i32, %arg0 : i32, i32
  }
  func.func @transform_3(%arg0: i32) -> (i32, i32) {
    %c0_i32 = arith.constant 0 : i32
    %c0_i32_0 = arith.constant 0 : i32
    return %c0_i32, %arg0 : i32, i32
  }
  func.func @transform_4(%arg0: i32) -> (i32, i32) {
    %c0_i32 = arith.constant 0 : i32
    %c0_i32_0 = arith.constant 0 : i32
    return %arg0, %c0_i32 : i32, i32
  }
  func.func @transform_5(%arg0: i32) -> (i32, i32) {
    %c0_i32 = arith.constant 0 : i32
    %c0_i32_0 = arith.constant 0 : i32
    %c0_i32_1 = arith.constant 0 : i32
    return %c0_i32, %c0_i32_0 : i32, i32
  }
  func.func @transform_6(%arg0: i32) -> (i32, i32) {
    %c0_i32 = arith.constant 0 : i32
    %c0_i32_0 = arith.constant 0 : i32
    return %c0_i32, %arg0 : i32, i32
  }
  func.func @transform_7(%arg0: i32) -> (i32, i32) {
    %c0_i32 = arith.constant 0 : i32
    %c0_i32_0 = arith.constant 0 : i32
    %c0_i32_1 = arith.constant 0 : i32
    return %c0_i32, %c0_i32_0 : i32, i32
  }
}

</mosaic_0001>

<llo_original>
// kernel: all_model_head_forward.1
$region0: #{all_model_head_forward.1}
  #allocation0 [shape = 'u32[]', space=smem, size = 0x4, offset = 0x4, fixed_abs, tag = 'smem constant byte address 0x4 - core index']
  #allocation1 [shape = 'u32[144,128]{1,0:T(1,128)}', space=vmem, size = 0x12000, scoped, tag = 'internal scratch']
  %s0 = inlined_call_operand.vmem [shape: f32[8,32], index: 0, kind: input, shape index: {}]
  %s1 = inlined_call_operand.vmem [shape: bf16[32,256], index: 1, kind: input, shape index: {}]
  %s2 = inlined_call_operand.vmem [shape: f32[1,256], index: 2, kind: input, shape index: {}]
  %s3 = inlined_call_operand.vmem [shape: f32[1,256], index: 3, kind: input, shape index: {}]
  %s4 = inlined_call_operand.vmem [shape: bf16[256,12], index: 4, kind: input, shape index: {}]
  %s5 = inlined_call_operand.vmem [shape: f32[1,12], index: 5, kind: input, shape index: {}]
  %s6 = inlined_call_operand.hbm [shape: f32[8,256], index: 6, kind: output, shape index: {0}]
  %s7 = inlined_call_operand.hbm [shape: f32[8,12], index: 7, kind: output, shape index: {1}]
  %8 = xla_tuple %s6, %s7
  %s9 = sld [smem:[#allocation0]]
  $region110: #{all_model_head_forward.1} parent=0
    _
  %s11 = ssub.s32 1, %s9
  %s12 = scalar_select 0, %s11, %s9
  $region1: #{all_model_head_forward.1} parent=0
    #allocation2 [shape = 'u8[16384]{0}', space=vmem, size = 0x4000, scoped, tag = 'input window, operand 1']
    #allocation3 [shape = 'u8[8192]{0}', space=vmem, size = 0x2000, scoped, tag = 'output window, operand 0']
    #allocation4 [shape = 's32[2]{0}', space=sflag, size = 0x8, scoped, tag = 'scoped memory for all_model_head_forward.1']
    #allocation5 [shape = 'u8[4096]{0}', space=vmem, size = 0x1000, scoped, tag = 'output window, operand 1, single buffered']
    #allocation6 [shape = 's32[1]{0}', space=sflag, size = 0x4, scoped, tag = 'scoped memory for all_model_head_forward.1']
    %13 = vsyncpa [#allocation4], 0
    %s14 = scalar_lea.sflag [#allocation4], 1
    %15 = vsyncpa %s14, 0
    %16 = vsyncpa [#allocation6], 0
    loop: start=0, step=1, limit=4
    $region2: #{all_model_head_forward.1} parent=1 // loop_pre_header
      _
    $region3: #{all_model_head_forward.1} parent=1 // loop_header
      %s18 = sphi 0, %s22
      %p19 = scmp.ge.s32.totalorder %s18, 4
      %s26 = sphi 0, %s26
      %s28 = sphi 0, %s26
      %s29 = sphi 0, %s28
      %s43 = sphi 0, %s29
      %s49 = sphi 0, %s51
      %s52 = sphi 0, %s49
      %s53 = sphi 0, %s52
      %s69 = sphi 0, %s53
      %s75 = sphi 0, %s77
      %s78 = sphi 0, %s75
      %s79 = sphi 0, %s78
      %s95 = sphi 0, %s79
      %s101 = sphi 0, %s103
      %s104 = sphi 0, %s101
      %s105 = sphi 0, %s104
      %s121 = sphi 0, %s105
      %s127 = sphi 0, %s129
      %s130 = sphi 0, %s127
      %s131 = sphi 0, %s130
      %s147 = sphi 0, %s131
      %s151 = sphi 0, %s151
      %s153 = sphi 0, %s151
      %s154 = sphi 0, %s153
      %s168 = sphi 0, %s154
      %s174 = sphi 0, %s176
      %s177 = sphi 0, %s174
      %s178 = sphi 0, %s177
      %s194 = sphi 0, %s178
      %s198 = sphi 0, %s198
      %s200 = sphi 0, %s198
      %s201 = sphi 0, %s200
      %s215 = sphi 0, %s201
    $region4: #{all_model_head_forward.1} parent=1 // loop_header_branch
      %21 = sbr.rel (%p19) target = $region8
    $region5: #{all_model_head_forward.1} parent=1 // loop_body
      %s23 = ssub.s32 %s18, 1
      %s24 = ssub.s32 %s18, 2
      %s25 = sadd.s32 %s18, 1
      %s27 = sadd.s32 %s26, 1
      %p30 = scmp.eq.s32.totalorder %s18, 1
      %p31 = scmp.ne.s32.totalorder %s26, %s28
      %p32 = scmp.eq.s32.totalorder %s18, 0
      %p33 = por %p31, %p32
      %p34 = scmp.ne.s32.totalorder %s26, %s28
      %p35 = scmp.eq.s32.totalorder %s23, 1
      %p36 = por %p34, %p35
      %p37 = scmp.ne.s32.totalorder %s28, %s29
      %p38 = scmp.eq.s32.totalorder %s23, 0
      %p39 = por %p37, %p38
      %p40 = scmp.ne.s32.totalorder %s28, %s29
      %p41 = scmp.eq.s32.totalorder %s24, 1
      %p42 = por %p40, %p41
      %p44 = scmp.ne.s32.totalorder %s29, %s43
      %p45 = scmp.eq.s32.totalorder %s24, 0
      %p46 = por %p44, %p45
      %s47 = ssub.s32 %s18, %s25
      %p48 = scmp.eq.s32.totalorder %s47, 0
      %s50 = sadd.s32 %s49, 1
      %s51 = scalar_select %p48, %s49, %s50
      %p54 = pneg %p48
      %p55 = scmp.eq.s32.totalorder %s18, 1
      %p56 = por %p54, %p55
      %p57 = scmp.ne.s32.totalorder %s49, %s52
      %p58 = scmp.eq.s32.totalorder %s18, 0
      %p59 = por %p57, %p58
      %p60 = scmp.ne.s32.totalorder %s49, %s52
      %p61 = scmp.eq.s32.totalorder %s23, 1
      %p62 = por %p60, %p61
      %p63 = scmp.ne.s32.totalorder %s52, %s53
      %p64 = scmp.eq.s32.totalorder %s23, 0
      %p65 = por %p63, %p64
      %p66 = scmp.ne.s32.totalorder %s52, %s53
      %p67 = scmp.eq.s32.totalorder %s24, 1
      %p68 = por %p66, %p67
      %p70 = scmp.ne.s32.totalorder %s53, %s69
      %p71 = scmp.eq.s32.totalorder %s24, 0
      %p72 = por %p70, %p71
      %s73 = ssub.s32 %s18, %s25
      %p74 = scmp.eq.s32.totalorder %s73, 0
      %s76 = sadd.s32 %s75, 1
      %s77 = scalar_select %p74, %s75, %s76
      %p80 = pneg %p74
      %p81 = scmp.eq.s32.totalorder %s18, 1
      %p82 = por %p80, %p81
      %p83 = scmp.ne.s32.totalorder %s75, %s78
      %p84 = scmp.eq.s32.totalorder %s18, 0
      %p85 = por %p83, %p84
      %p86 = scmp.ne.s32.totalorder %s75, %s78
      %p87 = scmp.eq.s32.totalorder %s23, 1
      %p88 = por %p86, %p87
      %p89 = scmp.ne.s32.totalorder %s78, %s79
      %p90 = scmp.eq.s32.totalorder %s23, 0
      %p91 = por %p89, %p90
      %p92 = scmp.ne.s32.totalorder %s78, %s79
      %p93 = scmp.eq.s32.totalorder %s24, 1
      %p94 = por %p92, %p93
      %p96 = scmp.ne.s32.totalorder %s79, %s95
      %p97 = scmp.eq.s32.totalorder %s24, 0
      %p98 = por %p96, %p97
      %s99 = ssub.s32 %s18, %s25
      %p100 = scmp.eq.s32.totalorder %s99, 0
      %s102 = sadd.s32 %s101, 1
      %s103 = scalar_select %p100, %s101, %s102
      %p106 = pneg %p100
      %p107 = scmp.eq.s32.totalorder %s18, 1
      %p108 = por %p106, %p107
      %p109 = scmp.ne.s32.totalorder %s101, %s104
      %p110 = scmp.eq.s32.totalorder %s18, 0
      %p111 = por %p109, %p110
      %p112 = scmp.ne.s32.totalorder %s101, %s104
      %p113 = scmp.eq.s32.totalorder %s23, 1
      %p114 = por %p112, %p113
      %p115 = scmp.ne.s32.totalorder %s104, %s105
      %p116 = scmp.eq.s32.totalorder %s23, 0
      %p117 = por %p115, %p116
      %p118 = scmp.ne.s32.totalorder %s104, %s105
      %p119 = scmp.eq.s32.totalorder %s24, 1
      %p120 = por %p118, %p119
      %p122 = scmp.ne.s32.totalorder %s105, %s121
      %p123 = scmp.eq.s32.totalorder %s24, 0
      %p124 = por %p122, %p123
      %s125 = ssub.s32 %s18, %s25
      %p126 = scmp.eq.s32.totalorder %s125, 0
      %s128 = sadd.s32 %s127, 1
      %s129 = scalar_select %p126, %s127, %s128
      %p132 = pneg %p126
      %p133 = scmp.eq.s32.totalorder %s18, 1
      %p134 = por %p132, %p133
      %p135 = scmp.ne.s32.totalorder %s127, %s130
      %p136 = scmp.eq.s32.totalorder %s18, 0
      %p137 = por %p135, %p136
      %p138 = scmp.ne.s32.totalorder %s127, %s130
      %p139 = scmp.eq.s32.totalorder %s23, 1
      %p140 = por %p138, %p139
      %p141 = scmp.ne.s32.totalorder %s130, %s131
      %p142 = scmp.eq.s32.totalorder %s23, 0
      %p143 = por %p141, %p142
      %p144 = scmp.ne.s32.totalorder %s130, %s131
      %p145 = scmp.eq.s32.totalorder %s24, 1
      %p146 = por %p144, %p145
      %p148 = scmp.ne.s32.totalorder %s131, %s147
      %p149 = scmp.eq.s32.totalorder %s24, 0
      %p150 = por %p148, %p149
      %s152 = sadd.s32 %s151, 1
      %p155 = scmp.eq.s32.totalorder %s18, 1
      %p156 = scmp.ne.s32.totalorder %s151, %s153
      %p157 = scmp.eq.s32.totalorder %s18, 0
      %p158 = por %p156, %p157
      %p159 = scmp.ne.s32.totalorder %s151, %s153
      %p160 = scmp.eq.s32.totalorder %s23, 1
      %p161 = por %p159, %p160
      %p162 = scmp.ne.s32.totalorder %s153, %s154
      %p163 = scmp.eq.s32.totalorder %s23, 0
      %p164 = por %p162, %p163
      %p165 = scmp.ne.s32.totalorder %s153, %s154
      %p166 = scmp.eq.s32.totalorder %s24, 1
      %p167 = por %p165, %p166
      %p169 = scmp.ne.s32.totalorder %s154, %s168
      %p170 = scmp.eq.s32.totalorder %s24, 0
      %p171 = por %p169, %p170
      %s172 = ssub.s32 %s18, %s25
      %p173 = scmp.eq.s32.totalorder %s172, 0
      %s175 = sadd.s32 %s174, 1
      %s176 = scalar_select %p173, %s174, %s175
      %p179 = pneg %p173
      %p180 = scmp.eq.s32.totalorder %s18, 1
      %p181 = por %p179, %p180
      %p182 = scmp.ne.s32.totalorder %s174, %s177
      %p183 = scmp.eq.s32.totalorder %s18, 0
      %p184 = por %p182, %p183
      %p185 = scmp.ne.s32.totalorder %s174, %s177
      %p186 = scmp.eq.s32.totalorder %s23, 1
      %p187 = por %p185, %p186
      %p188 = scmp.ne.s32.totalorder %s177, %s178
      %p189 = scmp.eq.s32.totalorder %s23, 0
      %p190 = por %p188, %p189
      %p191 = scmp.ne.s32.totalorder %s177, %s178
      %p192 = scmp.eq.s32.totalorder %s24, 1
      %p193 = por %p191, %p192
      %p195 = scmp.ne.s32.totalorder %s178, %s194
      %p196 = scmp.eq.s32.totalorder %s24, 0
      %p197 = por %p195, %p196
      %s199 = sadd.s32 %s198, 1
      %p202 = scmp.eq.s32.totalorder %s18, 1
      %p203 = scmp.ne.s32.totalorder %s198, %s200
      %p204 = scmp.eq.s32.totalorder %s18, 0
      %p205 = por %p203, %p204
      %p206 = scmp.ne.s32.totalorder %s198, %s200
      %p207 = scmp.eq.s32.totalorder %s23, 1
      %p208 = por %p206, %p207
      %p209 = scmp.ne.s32.totalorder %s200, %s201
      %p210 = scmp.eq.s32.totalorder %s23, 0
      %p211 = por %p209, %p210
      %p212 = scmp.ne.s32.totalorder %s200, %s201
      %p213 = scmp.eq.s32.totalorder %s24, 1
      %p214 = por %p212, %p213
      %p216 = scmp.ne.s32.totalorder %s201, %s215
      %p217 = scmp.eq.s32.totalorder %s24, 0
      %p218 = por %p216, %p217
      %p219 = scmp.le.s32.totalorder 1, %s18
      %p220 = scmp.lt.s32.totalorder %s18, 3
      %p221 = pnand %p219, %p220
      %p222 = pneg %p221
      // Predicated region
      $region9: #{all_model_head_forward.1} parent=5 // pred_check
        _
      $region10: #{all_model_head_forward.1} parent=5 // pred_check_branch
        %224 = sbr.rel (%p221) target = $region12
      $region11: #{all_model_head_forward.1} parent=5 // pred_region
        %s225 = ssub.s32 %s18, 1
        // Predicated region
        $region13: #{all_model_head_forward.1} parent=11 // pred_check
          %p226 = pneg %p39
        $region14: #{all_model_head_forward.1} parent=11 // pred_check_branch
          %228 = sbr.rel (%p226) target = $region16
        $region15: #{all_model_head_forward.1} parent=11 // pred_region
          _
        $region16: #{all_model_head_forward.1} parent=11 // pred_fallthru
          _
        // Predicated region
        $region17: #{all_model_head_forward.1} parent=11 // pred_check
          %p229 = pneg %p164
        $region18: #{all_model_head_forward.1} parent=11 // pred_check_branch
          %231 = sbr.rel (%p229) target = $region20
        $region19: #{all_model_head_forward.1} parent=11 // pred_region
          _
        $region20: #{all_model_head_forward.1} parent=11 // pred_fallthru
          _
      $region12: #{all_model_head_forward.1} parent=5 // pred_fallthru
        _
      %p232 = scmp.lt.s32.totalorder %s18, 2
      // Predicated region
      $region21: #{all_model_head_forward.1} parent=5 // pred_check
        %p233 = pneg %p232
      $region22: #{all_model_head_forward.1} parent=5 // pred_check_branch
        %235 = sbr.rel (%p233) target = $region24
      $region23: #{all_model_head_forward.1} parent=5 // pred_region
        // Predicated region
        $region25: #{all_model_head_forward.1} parent=23 // pred_check
          %p236 = pneg %p59
        $region26: #{all_model_head_forward.1} parent=23 // pred_check_branch
          %238 = sbr.rel (%p236) target = $region28
        $region27: #{all_model_head_forward.1} parent=23 // pred_region
          %s239 = sand.u32 %s49, 1
          %s240 = sand.u32 %s49, 1
          %s241 = smul.addr %s240, 16
          %s242 = scalar_lea.vmem [#allocation2], %s241
          %s243 = smul.addr %s18, 4
          %s244 = scalar_lea.vmem %s1, %s243
          // Predicated region
          $region29: #{all_model_head_forward.1} parent=27 // pred_check
            _
          $region30: #{all_model_head_forward.1} parent=27 // pred_check_branch
            %246 = sbr.rel (0) target = $region32
          $region31: #{all_model_head_forward.1} parent=27 // pred_region
            // Predicated region
            $region33: #{all_model_head_forward.1} parent=31 // pred_check
              _
            $region34: #{all_model_head_forward.1} parent=31 // pred_check_branch
              %248 = sbr.rel target = $region36
            $region35: #{all_model_head_forward.1} parent=31 // pred_region
              // Predicated region
              $region48: #{all_model_head_forward.1} parent=35 // pred_check
                _
              $region49: #{all_model_head_forward.1} parent=35 // pred_check_branch
                %270 = sbr.rel (0) target = $region51
              $region50: #{all_model_head_forward.1} parent=35 // pred_region
                loop: start=0, step=1, limit=1
                $region52: #{all_model_head_forward.1} parent=50 // loop_pre_header
                  _
                $region53: #{all_model_head_forward.1} parent=50 // loop_header
                  %s272 = sphi 0, %s276
                  %p273 = scmp.ge.s32.totalorder %s272, 1
                  %s277 = sphi %s244, %s244
                  %s278 = sphi %s242, %s242
                $region54: #{all_model_head_forward.1} parent=50 // loop_header_branch
                  %275 = sbr.rel (%p273) target = $region58
                $region55: #{all_model_head_forward.1} parent=50 // loop_body
                  _
                $region56: #{all_model_head_forward.1} parent=50 // loop_footer
                  %s276 = sadd.s32 1, %s272
                $region57: #{all_model_head_forward.1} parent=50 // loop_footer_branch
                  %271 = sbr.rel target = $region53
                $region58: #{all_model_head_forward.1} parent=50 // loop_exit
                  _
                %s280 = ssub.s32 16, 1
                loop: start=0, step=1, limit=1
                $region59: #{all_model_head_forward.1} parent=50 // loop_pre_header
                  _
                $region60: #{all_model_head_forward.1} parent=50 // loop_header
                  %s282 = sphi 0, %s286
                  %p283 = scmp.ge.s32.totalorder %s282, 1
                  %s287 = sphi %s244, %s244
                  %s288 = sphi %s242, %s242
                $region61: #{all_model_head_forward.1} parent=50 // loop_header_branch
                  %285 = sbr.rel (%p283) target = $region65
                $region62: #{all_model_head_forward.1} parent=50 // loop_body
                  %v289 = vld [vmem:[%s287] sm:%s280]
                  %290 = vst [vmem:[%s288] sm:%s280] %v289
                  %v291 = vld [vmem:[%s287 + $0x8] sm:%s280]
                  %292 = vst [vmem:[%s288 + $0x4] sm:%s280] %v291
                  %v293 = vld [vmem:[%s287 + $0x10] sm:%s280]
                  %294 = vst [vmem:[%s288 + $0x8] sm:%s280] %v293
                  %v295 = vld [vmem:[%s287 + $0x18] sm:%s280]
                  %296 = vst [vmem:[%s288 + $0xc] sm:%s280] %v295
                $region63: #{all_model_head_forward.1} parent=50 // loop_footer
                  %s286 = sadd.s32 1, %s282
                $region64: #{all_model_head_forward.1} parent=50 // loop_footer_branch
                  %281 = sbr.rel target = $region60
                $region65: #{all_model_head_forward.1} parent=50 // loop_exit
                  _
              $region51: #{all_model_head_forward.1} parent=35 // pred_fallthru
                _
            $region36: #{all_model_head_forward.1} parent=31 // pred_fallthru
              _
            // Predicated region
            $region37: #{all_model_head_forward.1} parent=31 // pred_check
              _
            $region38: #{all_model_head_forward.1} parent=31 // pred_check_branch
              %250 = sbr.rel (0) target = $region40
            $region39: #{all_model_head_forward.1} parent=31 // pred_region
              %s252 = ssub.s32 16, 1
              loop: start=0, step=1, limit=1
              $region41: #{all_model_head_forward.1} parent=39 // loop_pre_header
                _
              $region42: #{all_model_head_forward.1} parent=39 // loop_header
                %s254 = sphi 0, %s258
                %p255 = scmp.ge.s32.totalorder %s254, 1
                %s259 = sphi %s244, %s244
                %s260 = sphi %s242, %s242
              $region43: #{all_model_head_forward.1} parent=39 // loop_header_branch
                %257 = sbr.rel (%p255) target = $region47
              $region44: #{all_model_head_forward.1} parent=39 // loop_body
                %v261 = vld [vmem:[%s259] sm:%s252]
                %262 = vst [vmem:[%s260] sm:%s252] %v261
                %v263 = vld [vmem:[%s259 + $0x8] sm:%s252]
                %264 = vst [vmem:[%s260 + $0x4] sm:%s252] %v263
                %v265 = vld [vmem:[%s259 + $0x10] sm:%s252]
                %266 = vst [vmem:[%s260 + $0x8] sm:%s252] %v265
                %v267 = vld [vmem:[%s259 + $0x18] sm:%s252]
                %268 = vst [vmem:[%s260 + $0xc] sm:%s252] %v267
              $region45: #{all_model_head_forward.1} parent=39 // loop_footer
                %s258 = sadd.s32 1, %s254
              $region46: #{all_model_head_forward.1} parent=39 // loop_footer_branch
                %253 = sbr.rel target = $region42
              $region47: #{all_model_head_forward.1} parent=39 // loop_exit
                _
            $region40: #{all_model_head_forward.1} parent=31 // pred_fallthru
              _
          $region32: #{all_model_head_forward.1} parent=27 // pred_fallthru
            _
          %297 = vnop
        $region28: #{all_model_head_forward.1} parent=23 // pred_fallthru
          _
        // Predicated region
        $region66: #{all_model_head_forward.1} parent=23 // pred_check
          %p298 = pneg %p85
        $region67: #{all_model_head_forward.1} parent=23 // pred_check_branch
          %300 = sbr.rel (%p298) target = $region69
        $region68: #{all_model_head_forward.1} parent=23 // pred_region
          %p301 = scmp.lt.s32.totalorder %s18, 1
          %s302 = scalar_select %p301, %s18, 1
          %s303 = scalar_lea.vmem %s2, %s302
        $region69: #{all_model_head_forward.1} parent=23 // pred_fallthru
          _
        // Predicated region
        $region70: #{all_model_head_forward.1} parent=23 // pred_check
          %p304 = pneg %p111
        $region71: #{all_model_head_forward.1} parent=23 // pred_check_branch
          %306 = sbr.rel (%p304) target = $region73
        $region72: #{all_model_head_forward.1} parent=23 // pred_region
          %p307 = scmp.lt.s32.totalorder %s18, 1
          %s308 = scalar_select %p307, %s18, 1
          %s309 = scalar_lea.vmem %s3, %s308
        $region73: #{all_model_head_forward.1} parent=23 // pred_fallthru
          _
        // Predicated region
        $region74: #{all_model_head_forward.1} parent=23 // pred_check
          %p310 = pneg %p137
        $region75: #{all_model_head_forward.1} parent=23 // pred_check_branch
          %312 = sbr.rel (%p310) target = $region77
        $region76: #{all_model_head_forward.1} parent=23 // pred_region
          %s313 = smul.u32 16, %s18
          %p314 = scmp.lt.s32.totalorder %s313, 31
          %s315 = scalar_select %p314, %s313, 31
          %s316 = smul.addr %s315, 4
          %s317 = scalar_lea.vmem %s4, %s316
          %s318 = smul.u32 16, %s18
        $region77: #{all_model_head_forward.1} parent=23 // pred_fallthru
          _
      $region24: #{all_model_head_forward.1} parent=5 // pred_fallthru
        _
      %p319 = scmp.le.s32.totalorder 1, %s18
      %p320 = scmp.lt.s32.totalorder %s18, 3
      %p321 = pnand %p319, %p320
      %p322 = pneg %p321
      // Predicated region
      $region78: #{all_model_head_forward.1} parent=5 // pred_check
        _
      $region79: #{all_model_head_forward.1} parent=5 // pred_check_branch
        %324 = sbr.rel (%p321) target = $region81
      $region80: #{all_model_head_forward.1} parent=5 // pred_region
        %s325 = ssub.s32 %s18, 1
        %s326 = sand.u32 %s52, 1
        %s327 = sand.u32 %s52, 1
        %s328 = smul.addr %s327, 16
        %s329 = scalar_lea.vmem [#allocation2], %s328
        // Predicated region
        $region82: #{all_model_head_forward.1} parent=80 // pred_check
          %p330 = pneg %p65
        $region83: #{all_model_head_forward.1} parent=80 // pred_check_branch
          %332 = sbr.rel (%p330) target = $region85
        $region84: #{all_model_head_forward.1} parent=80 // pred_region
          _
        $region85: #{all_model_head_forward.1} parent=80 // pred_fallthru
          _
        %p333 = pneg %p39
        %p334 = pneg %p36
        %s335 = sand.u32 %s52, 1
        %s336 = sand.u32 %s52, 1
        %s337 = smul.addr %s336, 16
        %s338 = scalar_lea.vmem [#allocation2], %s337
        %p339 = pneg %p65
        %p340 = pneg %p62
        %p341 = scmp.lt.s32.totalorder %s23, 1
        %s342 = scalar_select %p341, %s23, 1
        %s343 = scalar_lea.vmem %s2, %s342
        %p344 = pneg %p91
        %p345 = pneg %p88
        %p346 = scmp.lt.s32.totalorder %s23, 1
        %s347 = scalar_select %p346, %s23, 1
        %s348 = scalar_lea.vmem %s3, %s347
        %p349 = pneg %p117
        %p350 = pneg %p114
        %s351 = smul.u32 16, %s23
        %p352 = scmp.lt.s32.totalorder %s351, 31
        %s353 = scalar_select %p352, %s351, 31
        %s354 = smul.addr %s353, 4
        %s355 = scalar_lea.vmem %s4, %s354
        %p356 = pneg %p143
        %p357 = pneg %p140
        %p358 = pneg %p164
        %p359 = pneg %p161
        %p360 = pneg %p190
        %p361 = pneg %p187
        %s362 = sand.u32 %s177, 1
        %s363 = scalar_lea.sflag [#allocation4], %s362
        %s364 = sand.u32 %s177, 1
        %s365 = smul.addr %s364, 8
        %s366 = scalar_lea.vmem [#allocation3], %s365
        %p367 = pneg %p211
        %p368 = pneg %p208
        %p369 = scmp.lt.s32.totalorder %s23, 1
        %s370 = scalar_select %p369, %s23, 1
        %s371 = scalar_lea.vmem %s2, %s370
        %p372 = scmp.lt.s32.totalorder %s23, 1
        %s373 = scalar_select %p372, %s23, 1
        %s374 = scalar_lea.vmem %s3, %s373
        %s375 = smul.u32 16, %s23
        %p376 = scmp.lt.s32.totalorder %s375, 31
        %s377 = scalar_select %p376, %s375, 31
        %s378 = smul.addr %s377, 4
        %s379 = scalar_lea.vmem %s4, %s378
        %s380 = smul.u32 16, %s23
        %v382 = vld [vmem:[%s0] sm:$0xff]
        %v383 = vpack.c.bf16 %v382, %v382
        %v384 = vld [vmem:[%s329] sm:$0xf]
        %v385 = vld [vmem:[%s329 + $0x4] sm:$0xf]
        %v386 = vld [vmem:[%s329 + $0x8] sm:$0xf]
        %v387 = vld [vmem:[%s329 + $0xc] sm:$0xf]
        %v392 = vunpack.c.l.b16 %v384
        %v393 = vunpack.c.l.b16 %v385
        %v394 = vunpack.c.l.b16 %v386
        %v395 = vunpack.c.l.b16 %v387
        %v396 = vpack.c.b16 %v393, %v392
        %v397 = vpack.c.b16 %v395, %v394
        %vm400 = vcmask 261120
        %v402 = vsel %vm400, %v383, 0
        %404 = vmatprep.subr.bf16.mxu0 0
        %405 = vmatpush1.bf16.msra.mxu0 0
        %406 = vmatprep.subr.bf16.mxu0 0
        %407 = vmatpush1.bf16.msra.mxu0 0
        %408 = vmatprep.subr.bf16.mxu0 0
        %409 = vmatpush1.bf16.msra.mxu0 0
        %410 = vmatprep.subr.bf16.mxu0 0
        %411 = vmatpush1.bf16.msra.mxu0 0
        %412 = vmatprep.subr.bf16.mxu0 0
        %413 = vmatpush1.bf16.msra.mxu0 0
        %414 = vmatprep.subr.bf16.mxu0 0
        %415 = vmatpush1.bf16.msra.mxu0 0
        %416 = vmatprep.subr.bf16.mxu0 0
        %417 = vmatpush1.bf16.msra.mxu0 %v397
        %418 = vmatprep.subr.bf16.mxu0 0
        %419 = vmatpush1.bf16.msra.mxu0 %v396
        %420 = vmatprep.subr.bf16.mxu0 0
        %421 = vmatpush2.bf16.msra.mxu0 0
        %422 = vmatprep.subr.bf16.mxu0 0
        %423 = vmatpush2.bf16.msra.mxu0 0
        %424 = vmatprep.subr.bf16.mxu0 0
        %425 = vmatpush2.bf16.msra.mxu0 0
        %426 = vmatprep.subr.bf16.mxu0 0
        %427 = vmatpush2.bf16.msra.mxu0 0
        %428 = vmatprep.subr.bf16.mxu0 0
        %429 = vmatpush2.bf16.msra.mxu0 0
        %430 = vmatprep.subr.bf16.mxu0 0
        %431 = vmatpush2.bf16.msra.mxu0 0
        %432 = vmatprep.subr.bf16.mxu0 0
        %433 = vmatpush2.bf16.msra.mxu0 0
        %434 = vmatprep.subr.bf16.mxu0 0
        %435 = vmatpush2.bf16.msra.mxu0 0
        %436 = vmatprep.mubr.bf16.mxu0 0
        %437 = vmatmul.mubr.bf16.gmra.mxu0 %v402
        %v438 = vpop.f32.mrf.mxu0
        %v439 = vadd.f32 0.0, %v438
        %v440 = vpop.f32.mrf.mxu0
        %v441 = vpop.f32.mrf.mxu0
        %v442 = vpop.f32.mrf.mxu0
        %443 = vdwg.mxu0
        %v444 = vrot.slane %v439, 4
        %v445 = vadd.f32 %v439, %v444
        %v446 = vrot.slane %v445, 2
        %v447 = vadd.f32 %v445, %v446
        %v448 = vrot.slane %v447, 1
        %v449 = vadd.f32 %v447, %v448
        %v450 = vrcp.pop 8.0
        %v451 = vmul.f32 %v449, %v450
        %v452 = vsub.f32 %v439, %v451
        %v453 = vmul.f32 %v452, %v452
        %v454 = vrot.slane %v453, 4
        %v455 = vadd.f32 %v453, %v454
        %v456 = vrot.slane %v455, 2
        %v457 = vadd.f32 %v455, %v456
        %v458 = vrot.slane %v457, 1
        %v459 = vadd.f32 %v457, %v458
        %v460 = vmul.f32 %v459, %v450
        %v461 = vld [vmem:[%s371] sm:$0x1]
        %v462 = vadd.f32 %v460, 1e-05
        %v463 = vrsqrt.pop %v462
        %v464 = vmul.f32 %v461, %v463
        %v465 = vld [vmem:[%s374] sm:$0x1]
        %v466 = vmul.f32 %v451, %v464
        %v467 = vsub.f32 %v465, %v466
        %v469 = vlaneseq
        %v470 = vshrl.u32 %v469, 7
        %v471 = vsub.s32 0, %v470
        %v472 = vrot.slane %v464, %v471
        %v474 = vmul.f32 %v439, %v472
        %v476 = vlaneseq
        %v477 = vshrl.u32 %v476, 7
        %v478 = vsub.s32 0, %v477
        %v479 = vrot.slane %v467, %v478
        %v481 = vadd.f32 %v474, %v479
        %482 = vst [vmem:[%s366] sm:$0xff] %v481
        %p483 = scmp.eq.s32.totalorder %s23, 0
        // Predicated region
        $region86: #{all_model_head_forward.1} parent=80 // pred_check
          %p484 = pneg %p483
        $region87: #{all_model_head_forward.1} parent=80 // pred_check_branch
          %486 = sbr.rel (%p484) target = $region89
        $region88: #{all_model_head_forward.1} parent=80 // pred_region
          %v487 = vld [vmem:[%s5] sm:$0x1]
          %v489 = vlaneseq
          %v490 = vshrl.u32 %v489, 7
          %v491 = vsub.s32 0, %v490
          %v492 = vrot.slane %v487, %v491
          %vm494 = vcmask 97280
          %495 = vst.msk [vmem:[#allocation5] sm:$0xff] %vm494, %v492
        $region89: #{all_model_head_forward.1} parent=80 // pred_fallthru
          _
        %v496 = vld [vmem:[#allocation5] sm:$0xff]
        %v497 = vpack.c.bf16 %v481, %v481
        %v498 = vld [vmem:[%s379] sm:$0xf]
        %v499 = vld [vmem:[%s379 + $0x4] sm:$0xf]
        %v500 = vld [vmem:[%s379 + $0x8] sm:$0xf]
        %v501 = vld [vmem:[%s379 + $0xc] sm:$0xf]
        %v502 = vld [vmem:[%s379 + $0x10] sm:$0xf]
        %v503 = vld [vmem:[%s379 + $0x14] sm:$0xf]
        %v504 = vld [vmem:[%s379 + $0x18] sm:$0xf]
        %v505 = vld [vmem:[%s379 + $0x1c] sm:$0xf]
        %v506 = vld [vmem:[%s379 + $0x20] sm:$0xf]
        %v507 = vld [vmem:[%s379 + $0x24] sm:$0xf]
        %v508 = vld [vmem:[%s379 + $0x28] sm:$0xf]
        %v509 = vld [vmem:[%s379 + $0x2c] sm:$0xf]
        %v510 = vld [vmem:[%s379 + $0x30] sm:$0xf]
        %v511 = vld [vmem:[%s379 + $0x34] sm:$0xf]
        %v512 = vld [vmem:[%s379 + $0x38] sm:$0xf]
        %v513 = vld [vmem:[%s379 + $0x3c] sm:$0xf]
        %v530 = vunpack.c.l.b16 %v498
        %v531 = vunpack.c.l.b16 %v499
        %v532 = vunpack.c.l.b16 %v500
        %v533 = vunpack.c.l.b16 %v501
        %v534 = vunpack.c.l.b16 %v502
        %v535 = vunpack.c.l.b16 %v503
        %v536 = vunpack.c.l.b16 %v504
        %v537 = vunpack.c.l.b16 %v505
        %v538 = vunpack.c.l.b16 %v506
        %v539 = vunpack.c.l.b16 %v507
        %v540 = vunpack.c.l.b16 %v508
        %v541 = vunpack.c.l.b16 %v509
        %v542 = vunpack.c.l.b16 %v510
        %v543 = vunpack.c.l.b16 %v511
        %v544 = vunpack.c.l.b16 %v512
        %v545 = vunpack.c.l.b16 %v513
        %v546 = vpack.c.b16 %v531, %v530
        %v547 = vpack.c.b16 %v533, %v532
        %v548 = vpack.c.b16 %v535, %v534
        %v549 = vpack.c.b16 %v537, %v536
        %v550 = vpack.c.b16 %v539, %v538
        %v551 = vpack.c.b16 %v541, %v540
        %v552 = vpack.c.b16 %v543, %v542
        %v553 = vpack.c.b16 %v545, %v544
        %562 = vmatprep.subr.bf16.mxu0 0
        %563 = vmatpush1.bf16.msra.mxu0 %v553
        %564 = vmatprep.subr.bf16.mxu0 0
        %565 = vmatpush1.bf16.msra.mxu0 %v552
        %566 = vmatprep.subr.bf16.mxu0 0
        %567 = vmatpush1.bf16.msra.mxu0 %v551
        %568 = vmatprep.subr.bf16.mxu0 0
        %569 = vmatpush1.bf16.msra.mxu0 %v550
        %570 = vmatprep.subr.bf16.mxu0 0
        %571 = vmatpush1.bf16.msra.mxu0 %v549
        %572 = vmatprep.subr.bf16.mxu0 0
        %573 = vmatpush1.bf16.msra.mxu0 %v548
        %574 = vmatprep.subr.bf16.mxu0 0
        %575 = vmatpush1.bf16.msra.mxu0 %v547
        %576 = vmatprep.subr.bf16.mxu0 0
        %577 = vmatpush1.bf16.msra.mxu0 %v546
        %578 = vmatprep.subr.bf16.mxu0 0
        %579 = vmatpush2.bf16.msra.mxu0 0
        %580 = vmatprep.subr.bf16.mxu0 0
        %581 = vmatpush2.bf16.msra.mxu0 0
        %582 = vmatprep.subr.bf16.mxu0 0
        %583 = vmatpush2.bf16.msra.mxu0 0
        %584 = vmatprep.subr.bf16.mxu0 0
        %585 = vmatpush2.bf16.msra.mxu0 0
        %586 = vmatprep.subr.bf16.mxu0 0
        %587 = vmatpush2.bf16.msra.mxu0 0
        %588 = vmatprep.subr.bf16.mxu0 0
        %589 = vmatpush2.bf16.msra.mxu0 0
        %590 = vmatprep.subr.bf16.mxu0 0
        %591 = vmatpush2.bf16.msra.mxu0 0
        %592 = vmatprep.subr.bf16.mxu0 0
        %593 = vmatpush2.bf16.msra.mxu0 0
        %594 = vmatprep.mubr.bf16.mxu0 0
        %595 = vmatmul.mubr.bf16.gmra.mxu0 %v497
        %v596 = vpop.f32.mrf.mxu0
        %v597 = vadd.f32 0.0, %v596
        %v598 = vpop.f32.mrf.mxu0
        %v599 = vpop.f32.mrf.mxu0
        %v600 = vpop.f32.mrf.mxu0
        %601 = vdwg.mxu0
        %v602 = vadd.f32 %v496, %v597
        %vm603 = vcmask 97280
        %604 = vst.msk [vmem:[#allocation5] sm:$0xff] %vm603, %v602
        %s605 = sand.u32 %s177, 1
        %s606 = scalar_lea.sflag [#allocation4], %s605
        %s607 = sand.u32 %s177, 1
        %s608 = smul.addr %s607, 8
        %s609 = scalar_lea.vmem [#allocation3], %s608
        // Predicated region
        $region90: #{all_model_head_forward.1} parent=80 // pred_check
          %p610 = pneg %p187
        $region91: #{all_model_head_forward.1} parent=80 // pred_check_branch
          %612 = sbr.rel (%p610) target = $region93
        $region92: #{all_model_head_forward.1} parent=80 // pred_region
          %s614 = ssub.s32 128, 128
          %615 = vsyncadd %s606, %s614
          %s616 = smul.addr %s23, 128
          %s617 = scalar_lea.hbm %s6, %s616
          %s619 = sshll.u32 %s609, 4
          %s620 = int_to_ptr.vmem [resolvable:$true] %s619
          %622 = dma.vmem_to_hbm [thread:$0]  %s620, 128, %s617, %s606
        $region93: #{all_model_head_forward.1} parent=80 // pred_fallthru
          _
        // Predicated region
        $region94: #{all_model_head_forward.1} parent=80 // pred_check
          %p623 = pneg %p208
        $region95: #{all_model_head_forward.1} parent=80 // pred_check_branch
          %625 = sbr.rel (%p623) target = $region97
        $region96: #{all_model_head_forward.1} parent=80 // pred_region
          %s627 = ssub.s32 128, 128
          %628 = vsyncadd [#allocation6], %s627
          %s630 = sshll.u32 [#allocation5], 4
          %s631 = int_to_ptr.vmem [resolvable:$true] %s630
          %633 = dma.vmem_to_hbm [thread:$0]  %s631, 128, %s7, [#allocation6]
        $region97: #{all_model_head_forward.1} parent=80 // pred_fallthru
          _
        // Predicated region
        $region98: #{all_model_head_forward.1} parent=80 // pred_check
          %p634 = pneg %p208
        $region99: #{all_model_head_forward.1} parent=80 // pred_check_branch
          %636 = sbr.rel (%p634) target = $region101
        $region100: #{all_model_head_forward.1} parent=80 // pred_region
          %637 = dma.done [#allocation6], 128
        $region101: #{all_model_head_forward.1} parent=80 // pred_fallthru
          _
      $region81: #{all_model_head_forward.1} parent=5 // pred_fallthru
        _
      %p638 = scmp.le.s32.totalorder 2, %s18
      // Predicated region
      $region102: #{all_model_head_forward.1} parent=5 // pred_check
        %p639 = pneg %p638
      $region103: #{all_model_head_forward.1} parent=5 // pred_check_branch
        %641 = sbr.rel (%p639) target = $region105
      $region104: #{all_model_head_forward.1} parent=5 // pred_region
        %s642 = ssub.s32 %s18, 2
        // Predicated region
        $region106: #{all_model_head_forward.1} parent=104 // pred_check
          %p643 = pneg %p193
        $region107: #{all_model_head_forward.1} parent=104 // pred_check_branch
          %645 = sbr.rel (%p643) target = $region109
        $region108: #{all_model_head_forward.1} parent=104 // pred_region
          %s646 = sand.u32 %s178, 1
          %s647 = scalar_lea.sflag [#allocation4], %s646
          %s648 = sand.u32 %s178, 1
          %s649 = smul.addr %s648, 8
          %s650 = scalar_lea.vmem [#allocation3], %s649
          %651 = dma.done %s647, 128
        $region109: #{all_model_head_forward.1} parent=104 // pred_fallthru
          _
      $region105: #{all_model_head_forward.1} parent=5 // pred_fallthru
        _
    $region6: #{all_model_head_forward.1} parent=1 // loop_footer
      %s22 = sadd.s32 1, %s18
    $region7: #{all_model_head_forward.1} parent=1 // loop_footer_branch
      %17 = sbr.rel target = $region3
    $region8: #{all_model_head_forward.1} parent=1 // loop_exit
      _
    %652 = vsyncpa [#allocation4], 1
    %s653 = scalar_lea.sflag [#allocation4], 1
    %654 = vsyncpa %s653, 1
    %655 = vsyncpa [#allocation6], 1

</llo_original>
